<compile_context>
chip_gen: v5e
topology: v5e:2x2
jax: 0.10.0
libtpu: 0.0.40
codegen_flags: <defaults>
</compile_context>

<pallas_src>
import functools

import jax
import jax.numpy as jnp
from jax.experimental import pallas as pl
from jax.experimental.pallas import tpu as pltpu

LANE = 128
NEG_BIG = -1e30
SRC_OFF = 0        # lane offset of per-head a_src in the attention-scalar output
DST_OFF = 64       # lane offset of per-head a_dst (supports up to 64 heads)
ACOLS = 128        # lane-dense width of the attention-scalar output
VMEM_LIMIT = 64 * 1024 * 1024


def _round_up(v, m):
    return ((v + m - 1) // m) * m


def _pad_axis(a, target, axis):
    pad = target - a.shape[axis]
    if pad <= 0:
        return a
    widths = [(0, 0)] * a.ndim
    widths[axis] = (0, pad)
    return jnp.pad(a, widths)


def _att_cat_matrix(att_src, att_dst, d_pad):
    """Concatenated block-diagonal attention matrix [d_pad, ACOLS] (bf16) so that ONE
    MXU matmul  xp @ attcat  yields per-head a_src (lanes SRC_OFF+k) and a_dst
    (lanes DST_OFF+k) simultaneously."""
    heads, out = att_src.shape
    m = jnp.zeros((d_pad, ACOLS), jnp.float32)
    for k in range(heads):
        m = m.at[k * out:(k + 1) * out, SRC_OFF + k].set(att_src[k])
        m = m.at[k * out:(k + 1) * out, DST_OFF + k].set(att_dst[k])
    return m.astype(jnp.bfloat16)


def _head_masks(heads, seg, d_pad):
    """[round_up(heads,8), d_pad] bf16 0/1 masks; row k selects head-k's lane slab."""
    hm = _round_up(heads, 8)
    m = jnp.zeros((hm, d_pad), jnp.float32)
    for k in range(heads):
        m = m.at[k, k * seg:(k + 1) * seg].set(1.0)
    return m.astype(jnp.bfloat16)


def _fold_matrix(heads, ncls, d_pad):
    """bf16 [d_pad, d_pad] matrix folding per-head slabs onto lanes [0, ncls) and
    averaging (concat=False, only used when out_heads > 1)."""
    eye = jnp.eye(ncls, dtype=jnp.float32) / float(heads)
    m = jnp.zeros((d_pad, d_pad), jnp.float32)
    for k in range(heads):
        m = m.at[k * ncls:(k + 1) * ncls, 0:ncls].set(eye)
    return m.astype(jnp.bfloat16)


# --------------------------- projection kernel (per layer) ---------------------------
def _proj_kernel(x_ref, w_ref, attcat_ref, xp_ref, acat_ref):
    # x @ W  (bf16 x bf16 -> f32 accumulate), stored bf16 for the aggregation kernel.
    xw = jnp.dot(x_ref[...], w_ref[...], preferred_element_type=jnp.float32)
    xw_bf = xw.astype(jnp.bfloat16)
    xp_ref[...] = xw_bf
    # Fused a_src | a_dst projection: ONE matmul, lane-dense [TM, ACOLS] output.
    acat_ref[...] = jnp.dot(xw_bf, attcat_ref[...],
                            preferred_element_type=jnp.float32)


def _project(x_bf, w_bf, attcat_bf, *, tm):
    n_pad, fp = x_bf.shape
    dp = w_bf.shape[1]
    return pl.pallas_call(
        _proj_kernel,
        out_shape=(jax.ShapeDtypeStruct((n_pad, dp), jnp.bfloat16),
                   jax.ShapeDtypeStruct((n_pad, ACOLS), jnp.float32)),
        grid=(n_pad // tm,),
        in_specs=[pl.BlockSpec((tm, fp), lambda i: (i, 0)),
                  pl.BlockSpec((fp, dp), lambda i: (0, 0)),
                  pl.BlockSpec((dp, ACOLS), lambda i: (0, 0))],
        out_specs=(pl.BlockSpec((tm, dp), lambda i: (i, 0)),
                   pl.BlockSpec((tm, ACOLS), lambda i: (i, 0))),
        compiler_params=pltpu.CompilerParams(
            dimension_semantics=("parallel",),
            vmem_limit_bytes=VMEM_LIMIT),
    )(x_bf, w_bf, attcat_bf)


# ----------------------- attention + aggregation kernel (per layer) -----------------------
def _agg_kernel(adj_ref, adst_ref, asrct_ref, xp_ref, masks_ref, bvec_ref, *rest,
                heads, mode, out_heads=1, negative_slope=0.2):
    if mode == "mean" and out_heads > 1:
        fold_ref, out_ref = rest
    else:
        (out_ref,) = rest

    tm = adj_ref.shape[0]
    dp = xp_ref.shape[1]

    # int8 adjacency tile -> additive mask bias, computed ONCE per tile for all heads.
    mask_bias = jnp.where(adj_ref[...] > 0, 0.0, NEG_BIG)          # [TM, N] f32

    xp = xp_ref[...]                                                # [N, Dp] bf16 (resident)
    acc = jnp.zeros((tm, dp), jnp.float32)

    for k in range(heads):                                          # small & static -> unrolled
        # e[i, j] = a_dst[i] + a_src[j]   (i = destination row in tile, j = source)
        e = adst_ref[:, DST_OFF + k:DST_OFF + k + 1] + asrct_ref[k:k + 1, :]
        e = jnp.where(e > 0, e, negative_slope * e)                 # LeakyReLU(0.2)
        e = e + mask_bias                                           # non-edges -> -1e30
        m = jnp.max(e, axis=-1, keepdims=True)
        p = jnp.exp(e - m)                                          # non-edges underflow to 0
        denom = jnp.sum(p, axis=-1, keepdims=True)
        inv = pl.reciprocal(jnp.maximum(denom, 1e-20), approx=True)
        alpha = (p * inv).astype(jnp.bfloat16)
        # Lane-dense aggregate: masked xp slab lands directly in head-k's lanes.
        xp_k = xp * masks_ref[k:k + 1, :]
        acc = acc + jnp.dot(alpha, xp_k, preferred_element_type=jnp.float32)

    if mode == "elu":                       # layer 1: concat heads, + bias, ELU, bf16 out
        h = acc + bvec_ref[...]
        h = jnp.where(h > 0, h, jnp.exp(jnp.minimum(h, 0.0)) - 1.0)
        out_ref[...] = h.astype(out_ref.dtype)
    else:                                   # layer 2: mean over heads, + bias, log_softmax
        if out_heads > 1:
            acc = jnp.dot(acc.astype(jnp.bfloat16), fold_ref[...],
                          preferred_element_type=jnp.float32)
        # bvec already contains bias + class-lane mask (-1e30 on padded lanes).
        logits = acc + bvec_ref[...]
        mx = jnp.max(logits, axis=-1, keepdims=True)
        sh = logits - mx
        lse = jnp.log(jnp.sum(jnp.exp(sh), axis=-1, keepdims=True))
        out_ref[...] = sh - lse


def _attend_aggregate(adj_i8, acat, xp_bf, masks_bf, bvec, *, heads, mode,
                      out_heads=1, fold_bf=None, out_dtype, tm):
    n_pad = adj_i8.shape[0]
    dp = xp_bf.shape[1]
    hm = _round_up(heads, 8)

    # Tiny per-node scalar transpose (a_src needs to be broadcast along lanes).
    asrct = _pad_axis(acat[:, SRC_OFF:SRC_OFF + heads].T, hm, 0)    # [hm, N_pad] f32

    inputs = [adj_i8, acat, asrct, xp_bf, masks_bf, bvec]
    in_specs = [
        pl.BlockSpec((tm, n_pad), lambda i: (i, 0)),    # adj tile (int8 stream)
        pl.BlockSpec((tm, ACOLS), lambda i: (i, 0)),    # a_dst (per-destination scalars)
        pl.BlockSpec((hm, n_pad), lambda i: (0, 0)),    # a_src^T, resident
        pl.BlockSpec((n_pad, dp), lambda i: (0, 0)),    # xp (all sources), resident
        pl.BlockSpec((hm, dp), lambda i: (0, 0)),       # per-head lane masks
        pl.BlockSpec((1, dp), lambda i: (0, 0)),        # bias (+ class-lane mask)
    ]
    if mode == "mean" and out_heads > 1:
        inputs.append(fold_bf)
        in_specs.append(pl.BlockSpec((dp, dp), lambda i: (0, 0)))

    kernel = functools.partial(_agg_kernel, heads=heads, mode=mode, out_heads=out_heads)
    return pl.pallas_call(
        kernel,
        out_shape=jax.ShapeDtypeStruct((n_pad, dp), out_dtype),
        grid=(n_pad // tm,),
        in_specs=in_specs,
        out_specs=pl.BlockSpec((tm, dp), lambda i: (i, 0)),
        compiler_params=pltpu.CompilerParams(
            dimension_semantics=("parallel",),
            vmem_limit_bytes=VMEM_LIMIT),
    )(*inputs)


# ------------------------------------ full forward ------------------------------------
def net_forward(x, adj, params, *, heads, hidden, out_heads, num_classes, tm=128):
    """tm: destination-row tile. 128 fills a v5e MXU; use >=256 on v6e/v7x (check the
    64 MiB v7x VMEM budget: adj tile + [TM, N] softmax temporaries scale with TM)."""
    n, f_in = x.shape
    d1 = heads * hidden
    d2 = out_heads * num_classes
    fp = _round_up(f_in, LANE)
    d1p = _round_up(d1, LANE)
    d2p = _round_up(d2, LANE)

    tm = max(32, _round_up(tm, 32))
    tm = min(tm, _round_up(n, 32))          # don't tile past the graph
    n_pad = _round_up(n, tm)

    # ---- wrapper-side padding / dtype prep (all semantically inert) ----
    x_p = _pad_axis(_pad_axis(x, n_pad, 0), fp, 1).astype(jnp.bfloat16)
    adj_i8 = _pad_axis(_pad_axis((adj > 0).astype(jnp.int8), n_pad, 0), n_pad, 1)

    w1_bf = _pad_axis(_pad_axis(params["w1"], fp, 0), d1p, 1).astype(jnp.bfloat16)
    attcat1 = _att_cat_matrix(params["asrc1"], params["adst1"], d1p)
    masks1 = _head_masks(heads, hidden, d1p)
    b1 = _pad_axis(params["b1"], d1p, 1)

    w2_bf = _pad_axis(_pad_axis(params["w2"], d1p, 0), d2p, 1).astype(jnp.bfloat16)
    attcat2 = _att_cat_matrix(params["asrc2"], params["adst2"], d2p)
    masks2 = _head_masks(out_heads, num_classes, d2p)
    cls_mask = jnp.where(jnp.arange(d2p) < num_classes, 0.0, NEG_BIG)[None, :]
    b2 = _pad_axis(params["b2"], d2p, 1) + cls_mask
    fold2 = _fold_matrix(out_heads, num_classes, d2p) if out_heads > 1 else None

    # ---- layer 1: project -> attend/aggregate -> (+bias, ELU), bf16 out ----
    xp1, acat1 = _project(x_p, w1_bf, attcat1, tm=tm)
    h = _attend_aggregate(adj_i8, acat1, xp1, masks1, b1, heads=heads,
                          mode="elu", out_dtype=jnp.bfloat16, tm=tm)

    # ---- layer 2: project -> attend/aggregate -> mean heads, +bias, log_softmax ----
    xp2, acat2 = _project(h, w2_bf, attcat2, tm=tm)
    out = _attend_aggregate(adj_i8, acat2, xp2, masks2, b2, heads=out_heads,
                            mode="mean", out_heads=out_heads, fold_bf=fold2,
                            out_dtype=jnp.float32, tm=tm)
    return out[:n, :num_classes]


def make_params(key, f_in, hidden, heads, num_classes, out_heads):
    ks = jax.random.split(key, 8)
    s1 = 1.0 / jnp.sqrt(jnp.float32(f_in))
    s2 = 1.0 / jnp.sqrt(jnp.float32(hidden * heads))
    return {
        "w1": jax.random.normal(ks[0], (f_in, heads * hidden), jnp.float32) * s1,
        "asrc1": jax.random.normal(ks[1], (heads, hidden), jnp.float32) * 0.1,
        "adst1": jax.random.normal(ks[2], (heads, hidden), jnp.float32) * 0.1,
        "b1": jnp.zeros((1, heads * hidden), jnp.float32),
        "w2": jax.random.normal(ks[3], (heads * hidden, out_heads * num_classes),
                                jnp.float32) * s2,
        "asrc2": jax.random.normal(ks[4], (out_heads, num_classes), jnp.float32) * 0.1,
        "adst2": jax.random.normal(ks[5], (out_heads, num_classes), jnp.float32) * 0.1,
        "b2": jnp.zeros((1, num_classes), jnp.float32),
    }


def net_reference(x, adj, params, *, heads, hidden, out_heads, num_classes, slope=0.2):
    """Pure-JAX f32 reference of the PyG GATConv forward (eval mode)."""
    def gat_layer(x, w, asrc, adst, b, h, d, concat):
        xp = x @ w
        xph = xp.reshape(-1, h, d)
        a_s = jnp.einsum("nhd,hd->nh", xph, asrc)
        a_d = jnp.einsum("nhd,hd->nh", xph, adst)
        e = a_d[:, None, :] + a_s[None, :, :]               # [dst, src, head]
        e = jnp.where(e > 0, e, slope * e)
        e = jnp.where((adj > 0)[:, :, None], e, -jnp.inf)
        alpha = jax.nn.softmax(e, axis=1)
        out = jnp.einsum("ijh,jhd->ihd", alpha, xph)
        out = out.reshape(-1, h * d) if concat else out.mean(axis=1)
        return out + b
    hmid = jax.nn.elu(gat_layer(x, params["w1"], params["asrc1"], params["adst1"],
                                params["b1"], heads, hidden, True))
    logits = gat_layer(hmid, params["w2"], params["asrc2"], params["adst2"],
                       params["b2"], out_heads, num_classes, False)
    return jax.nn.log_softmax(logits, axis=1)


if __name__ == "__main__":
    # Deterministic synthetic graph: bidirectional ring + self-loops.
    N = 384           # nodes (-> 3 grid steps at TM=128, exercises the row tiling)
    F_IN = 16         # dataset.num_features
    HIDDEN = 8        # args.hidden
    HEADS = 4         # args.heads
    NUM_CLASSES = 8   # dataset.num_classes
    OUT_HEADS = 1     # args.output_heads

    key = jax.random.PRNGKey(0)
    k_x, k_p = jax.random.split(key)
    x = jax.random.normal(k_x, (N, F_IN), jnp.float32)

    src = jnp.concatenate([jnp.arange(N), (jnp.arange(N) + 1) % N])
    dst = jnp.concatenate([(jnp.arange(N) + 1) % N, jnp.arange(N)])
    adj = jnp.zeros((N, N), jnp.float32).at[dst, src].set(1.0)
    adj = adj.at[jnp.arange(N), jnp.arange(N)].set(1.0)      # add_self_loops=True

    params = make_params(k_p, F_IN, HIDDEN, HEADS, NUM_CLASSES, OUT_HEADS)

    out = net_forward(x, adj, params, heads=HEADS, hidden=HIDDEN,
                      out_heads=OUT_HEADS, num_classes=NUM_CLASSES, tm=128)
    out = jax.block_until_ready(out)

    assert out.shape == (N, NUM_CLASSES)
    # log_softmax rows exponentiate-and-sum to 1.
    assert bool(jnp.all(jnp.abs(jnp.sum(jnp.exp(out), axis=1) - 1.0) < 1e-3))
    # Loose parity vs f32 reference (bf16 MXU operands + approx reciprocal).
    ref = net_reference(x, adj, params, heads=HEADS, hidden=HIDDEN,
                        out_heads=OUT_HEADS, num_classes=NUM_CLASSES)
    assert bool(jnp.max(jnp.abs(out - ref)) < 0.25)
    print("KERNEL_OK")
</pallas_src>

<mosaic_0001>
module attributes {stable_mosaic.version = 11 : i64} {
  func.func @_proj_kernel(%arg0: i32, %arg1: memref<128x128xbf16, #tpu.memory_space<vmem>>, %arg2: memref<128x128xbf16, #tpu.memory_space<vmem>>, %arg3: memref<128x128xbf16, #tpu.memory_space<vmem>>, %arg4: memref<128x128xbf16, #tpu.memory_space<vmem>>, %arg5: memref<128x128xf32, #tpu.memory_space<vmem>>) attributes {dimension_semantics = [#tpu.dimension_semantics<parallel>], iteration_bounds = array<i64: 3>, scalar_prefetch = 0 : i64, scratch_operands = 0 : i64, tpu.core_type = #tpu.core_type<tc>, window_params = [{transform_indices = @transform_0, window_bounds = array<i64: 128, 128>}, {pipeline_mode = #tpu.pipeline_mode<synchronous>, transform_indices = @transform_1, window_bounds = array<i64: 128, 128>}, {pipeline_mode = #tpu.pipeline_mode<synchronous>, transform_indices = @transform_2, window_bounds = array<i64: 128, 128>}, {transform_indices = @transform_3, window_bounds = array<i64: 128, 128>}, {transform_indices = @transform_4, window_bounds = array<i64: 128, 128>}]} {
    %c0 = arith.constant 0 : index
    %c0_0 = arith.constant 0 : index
    %0 = vector.load %arg1[%c0, %c0_0] : memref<128x128xbf16, #tpu.memory_space<vmem>>, vector<128x128xbf16>
    %c0_1 = arith.constant 0 : index
    %c0_2 = arith.constant 0 : index
    %1 = vector.load %arg2[%c0_1, %c0_2] : memref<128x128xbf16, #tpu.memory_space<vmem>>, vector<128x128xbf16>
    %cst = arith.constant dense<0.000000e+00> : vector<128x128xf32>
    %2 = tpu.matmul %0, %1, %cst {dimension_numbers = #tpu.dot_dimension_numbers<[1], [0], [0], [1], [0, 0, 1, 1], [], []>} : vector<128x128xbf16>, vector<128x128xbf16>, vector<128x128xf32> -> vector<128x128xf32>
    %3 = arith.truncf %2 : vector<128x128xf32> to vector<128x128xbf16>
    %c0_3 = arith.constant 0 : index
    %c0_4 = arith.constant 0 : index
    %4 = vector.load %arg4[%c0_3, %c0_4] : memref<128x128xbf16, #tpu.memory_space<vmem>>, vector<128x128xbf16>
    tpu.vector_store %arg4[%c0_3, %c0_4], %3 {strides = array<i32>} : memref<128x128xbf16, #tpu.memory_space<vmem>>, vector<128x128xbf16>,
    %c0_5 = arith.constant 0 : index
    %c0_6 = arith.constant 0 : index
    %5 = vector.load %arg3[%c0_5, %c0_6] : memref<128x128xbf16, #tpu.memory_space<vmem>>, vector<128x128xbf16>
    %cst_7 = arith.constant dense<0.000000e+00> : vector<128x128xf32>
    %6 = tpu.matmul %3, %5, %cst_7 {dimension_numbers = #tpu.dot_dimension_numbers<[1], [0], [0], [1], [0, 0, 1, 1], [], []>} : vector<128x128xbf16>, vector<128x128xbf16>, vector<128x128xf32> -> vector<128x128xf32>
    %c0_8 = arith.constant 0 : index
    %c0_9 = arith.constant 0 : index
    %7 = vector.load %arg5[%c0_8, %c0_9] : memref<128x128xf32, #tpu.memory_space<vmem>>, vector<128x128xf32>
    tpu.vector_store %arg5[%c0_8, %c0_9], %6 {strides = array<i32>} : memref<128x128xf32, #tpu.memory_space<vmem>>, vector<128x128xf32>,
    return
  }
  func.func @transform_0(%arg0: i32) -> (i32, i32) {
    %c0_i32 = arith.constant 0 : i32
    %c0_i32_0 = arith.constant 0 : i32
    return %arg0, %c0_i32 : i32, i32
  }
  func.func @transform_1(%arg0: i32) -> (i32, i32) {
    %c0_i32 = arith.constant 0 : i32
    %c0_i32_0 = arith.constant 0 : i32
    %c0_i32_1 = arith.constant 0 : i32
    return %c0_i32, %c0_i32_0 : i32, i32
  }
  func.func @transform_2(%arg0: i32) -> (i32, i32) {
    %c0_i32 = arith.constant 0 : i32
    %c0_i32_0 = arith.constant 0 : i32
    %c0_i32_1 = arith.constant 0 : i32
    return %c0_i32, %c0_i32_0 : i32, i32
  }
  func.func @transform_3(%arg0: i32) -> (i32, i32) {
    %c0_i32 = arith.constant 0 : i32
    %c0_i32_0 = arith.constant 0 : i32
    return %arg0, %c0_i32 : i32, i32
  }
  func.func @transform_4(%arg0: i32) -> (i32, i32) {
    %c0_i32 = arith.constant 0 : i32
    %c0_i32_0 = arith.constant 0 : i32
    return %arg0, %c0_i32 : i32, i32
  }
}

</mosaic_0001>

<llo_original>
// kernel: tpu_custom_call.1
$region0: #{tpu_custom_call.1}
  #allocation0 [shape = 'u32[]', space=smem, size = 0x4, offset = 0x4, fixed_abs, tag = 'smem constant byte address 0x4 - core index']
  #allocation1 [shape = 'u32[72,128]{1,0:T(1,128)}', space=vmem, size = 0x9000, scoped, tag = 'internal scratch']
  %s0 = inlined_call_operand.hbm [shape: bf16[384,128], index: 0, kind: input, shape index: {}]
  %s1 = inlined_call_operand.hbm [shape: bf16[128,128], index: 1, kind: input, shape index: {}]
  %s2 = inlined_call_operand.hbm [shape: bf16[128,128], index: 2, kind: input, shape index: {}]
  %s3 = inlined_call_operand.hbm [shape: bf16[384,128], index: 3, kind: output, shape index: {0}]
  %s4 = inlined_call_operand.hbm [shape: f32[384,128], index: 4, kind: output, shape index: {1}]
  %5 = xla_tuple %s3, %s4
  %s6 = sld [smem:[#allocation0]]
  $region65: #{tpu_custom_call.1} parent=0
    _
  %s8 = ssub.s32 1, %s6
  %s9 = scalar_select 0, %s8, %s6
  $region1: #{tpu_custom_call.1} parent=0
    #allocation2 [shape = 'u8[65536]{0}', space=vmem, size = 0x10000, scoped, tag = 'input window, operand 0']
    #allocation3 [shape = 's32[2]{0}', space=sflag, size = 0x8, scoped, tag = 'scoped memory for tpu_custom_call.1']
    #allocation4 [shape = 's32[2]{0}', space=sflag, size = 0x8, scoped, tag = 'scoped memory for tpu_custom_call.1']
    #allocation5 [shape = 'u8[32768]{0}', space=vmem, size = 0x8000, scoped, tag = 'input window, operand 1, single buffered']
    #allocation6 [shape = 's32[1]{0}', space=sflag, size = 0x4, scoped, tag = 'scoped memory for tpu_custom_call.1']
    #allocation7 [shape = 'u8[32768]{0}', space=vmem, size = 0x8000, scoped, tag = 'input window, operand 2, single buffered']
    #allocation8 [shape = 'u8[65536]{0}', space=vmem, size = 0x10000, scoped, tag = 'output window, operand 0']
    #allocation9 [shape = 'u8[131072]{0}', space=vmem, size = 0x20000, scoped, tag = 'output window, operand 1']
    #allocation10 [shape = 's32[2]{0}', space=sflag, size = 0x8, scoped, tag = 'scoped memory for tpu_custom_call.1']
    %10 = vsyncpa [#allocation3], 0
    %s11 = scalar_lea.sflag [#allocation3], 1
    %12 = vsyncpa %s11, 0
    %13 = vsyncpa [#allocation6], 0
    %14 = vsyncpa [#allocation4], 0
    %s15 = scalar_lea.sflag [#allocation4], 1
    %16 = vsyncpa %s15, 0
    %17 = vsyncpa [#allocation10], 0
    %s18 = scalar_lea.sflag [#allocation10], 1
    %19 = vsyncpa %s18, 0
    loop: start=0, step=1, limit=5
    $region2: #{tpu_custom_call.1} parent=1 // loop_pre_header
      _
    $region3: #{tpu_custom_call.1} parent=1 // loop_header
      %s21 = sphi 0, %s25
      %p22 = scmp.ge.s32.totalorder %s21, 5
      %s31 = sphi 0, %s33
      %s34 = sphi 0, %s31
      %s35 = sphi 0, %s34
      %s51 = sphi 0, %s35
      %s55 = sphi 0, %s55
      %s57 = sphi 0, %s55
      %s58 = sphi 0, %s57
      %s72 = sphi 0, %s58
      %s76 = sphi 0, %s76
      %s78 = sphi 0, %s76
      %s79 = sphi 0, %s78
      %s93 = sphi 0, %s79
      %s99 = sphi 0, %s101
      %s102 = sphi 0, %s99
      %s103 = sphi 0, %s102
      %s119 = sphi 0, %s103
      %s125 = sphi 0, %s127
      %s128 = sphi 0, %s125
      %s129 = sphi 0, %s128
      %s145 = sphi 0, %s129
    $region4: #{tpu_custom_call.1} parent=1 // loop_header_branch
      %24 = sbr.rel (%p22) target = $region8
    $region5: #{tpu_custom_call.1} parent=1 // loop_body
      %s26 = ssub.s32 %s21, 1
      %s27 = ssub.s32 %s21, 2
      %s28 = sadd.s32 %s21, 1
      %s29 = ssub.s32 %s21, %s28
      %p30 = scmp.eq.s32.totalorder %s29, 0
      %s32 = sadd.s32 %s31, 1
      %s33 = scalar_select %p30, %s31, %s32
      %p36 = pneg %p30
      %p37 = scmp.eq.s32.totalorder %s21, 2
      %p38 = por %p36, %p37
      %p39 = scmp.ne.s32.totalorder %s31, %s34
      %p40 = scmp.eq.s32.totalorder %s21, 0
      %p41 = por %p39, %p40
      %p42 = scmp.ne.s32.totalorder %s31, %s34
      %p43 = scmp.eq.s32.totalorder %s26, 2
      %p44 = por %p42, %p43
      %p45 = scmp.ne.s32.totalorder %s34, %s35
      %p46 = scmp.eq.s32.totalorder %s26, 0
      %p47 = por %p45, %p46
      %p48 = scmp.ne.s32.totalorder %s34, %s35
      %p49 = scmp.eq.s32.totalorder %s27, 2
      %p50 = por %p48, %p49
      %p52 = scmp.ne.s32.totalorder %s35, %s51
      %p53 = scmp.eq.s32.totalorder %s27, 0
      %p54 = por %p52, %p53
      %s56 = sadd.s32 %s55, 1
      %p59 = scmp.eq.s32.totalorder %s21, 2
      %p60 = scmp.ne.s32.totalorder %s55, %s57
      %p61 = scmp.eq.s32.totalorder %s21, 0
      %p62 = por %p60, %p61
      %p63 = scmp.ne.s32.totalorder %s55, %s57
      %p64 = scmp.eq.s32.totalorder %s26, 2
      %p65 = por %p63, %p64
      %p66 = scmp.ne.s32.totalorder %s57, %s58
      %p67 = scmp.eq.s32.totalorder %s26, 0
      %p68 = por %p66, %p67
      %p69 = scmp.ne.s32.totalorder %s57, %s58
      %p70 = scmp.eq.s32.totalorder %s27, 2
      %p71 = por %p69, %p70
      %p73 = scmp.ne.s32.totalorder %s58, %s72
      %p74 = scmp.eq.s32.totalorder %s27, 0
      %p75 = por %p73, %p74
      %s77 = sadd.s32 %s76, 1
      %p80 = scmp.eq.s32.totalorder %s21, 2
      %p81 = scmp.ne.s32.totalorder %s76, %s78
      %p82 = scmp.eq.s32.totalorder %s21, 0
      %p83 = por %p81, %p82
      %p84 = scmp.ne.s32.totalorder %s76, %s78
      %p85 = scmp.eq.s32.totalorder %s26, 2
      %p86 = por %p84, %p85
      %p87 = scmp.ne.s32.totalorder %s78, %s79
      %p88 = scmp.eq.s32.totalorder %s26, 0
      %p89 = por %p87, %p88
      %p90 = scmp.ne.s32.totalorder %s78, %s79
      %p91 = scmp.eq.s32.totalorder %s27, 2
      %p92 = por %p90, %p91
      %p94 = scmp.ne.s32.totalorder %s79, %s93
      %p95 = scmp.eq.s32.totalorder %s27, 0
      %p96 = por %p94, %p95
      %s97 = ssub.s32 %s21, %s28
      %p98 = scmp.eq.s32.totalorder %s97, 0
      %s100 = sadd.s32 %s99, 1
      %s101 = scalar_select %p98, %s99, %s100
      %p104 = pneg %p98
      %p105 = scmp.eq.s32.totalorder %s21, 2
      %p106 = por %p104, %p105
      %p107 = scmp.ne.s32.totalorder %s99, %s102
      %p108 = scmp.eq.s32.totalorder %s21, 0
      %p109 = por %p107, %p108
      %p110 = scmp.ne.s32.totalorder %s99, %s102
      %p111 = scmp.eq.s32.totalorder %s26, 2
      %p112 = por %p110, %p111
      %p113 = scmp.ne.s32.totalorder %s102, %s103
      %p114 = scmp.eq.s32.totalorder %s26, 0
      %p115 = por %p113, %p114
      %p116 = scmp.ne.s32.totalorder %s102, %s103
      %p117 = scmp.eq.s32.totalorder %s27, 2
      %p118 = por %p116, %p117
      %p120 = scmp.ne.s32.totalorder %s103, %s119
      %p121 = scmp.eq.s32.totalorder %s27, 0
      %p122 = por %p120, %p121
      %s123 = ssub.s32 %s21, %s28
      %p124 = scmp.eq.s32.totalorder %s123, 0
      %s126 = sadd.s32 %s125, 1
      %s127 = scalar_select %p124, %s125, %s126
      %p130 = pneg %p124
      %p131 = scmp.eq.s32.totalorder %s21, 2
      %p132 = por %p130, %p131
      %p133 = scmp.ne.s32.totalorder %s125, %s128
      %p134 = scmp.eq.s32.totalorder %s21, 0
      %p135 = por %p133, %p134
      %p136 = scmp.ne.s32.totalorder %s125, %s128
      %p137 = scmp.eq.s32.totalorder %s26, 2
      %p138 = por %p136, %p137
      %p139 = scmp.ne.s32.totalorder %s128, %s129
      %p140 = scmp.eq.s32.totalorder %s26, 0
      %p141 = por %p139, %p140
      %p142 = scmp.ne.s32.totalorder %s128, %s129
      %p143 = scmp.eq.s32.totalorder %s27, 2
      %p144 = por %p142, %p143
      %p146 = scmp.ne.s32.totalorder %s129, %s145
      %p147 = scmp.eq.s32.totalorder %s27, 0
      %p148 = por %p146, %p147
      %p149 = scmp.le.s32.totalorder 1, %s21
      %p150 = scmp.lt.s32.totalorder %s21, 4
      %p151 = pnand %p149, %p150
      %p152 = pneg %p151
      // Predicated region
      $region9: #{tpu_custom_call.1} parent=5 // pred_check
        _
      $region10: #{tpu_custom_call.1} parent=5 // pred_check_branch
        %154 = sbr.rel (%p151) target = $region12
      $region11: #{tpu_custom_call.1} parent=5 // pred_region
        %s155 = ssub.s32 %s21, 1
        // Predicated region
        $region13: #{tpu_custom_call.1} parent=11 // pred_check
          %p156 = pneg %p68
        $region14: #{tpu_custom_call.1} parent=11 // pred_check_branch
          %158 = sbr.rel (%p156) target = $region16
        $region15: #{tpu_custom_call.1} parent=11 // pred_region
          %160 = vsyncadd [#allocation6], 0
          %s161 = sshll.u32 %s1, 4
          %s162 = int_to_ptr.hbm [resolvable:$true] %s161
          %s163 = sshll.u32 [#allocation5], 4
          %s164 = int_to_ptr.vmem [resolvable:$true] %s163
          %169 = dma.hbm_to_vmem [thread:$0]  %s162, 1024, %s164, [#allocation6], 64, 64, 4
        $region16: #{tpu_custom_call.1} parent=11 // pred_fallthru
          _
        // Predicated region
        $region17: #{tpu_custom_call.1} parent=11 // pred_check
          %p170 = pneg %p89
        $region18: #{tpu_custom_call.1} parent=11 // pred_check_branch
          %172 = sbr.rel (%p170) target = $region20
        $region19: #{tpu_custom_call.1} parent=11 // pred_region
          %174 = vsyncadd [#allocation6], 0
          %s175 = sshll.u32 %s2, 4
          %s176 = int_to_ptr.hbm [resolvable:$true] %s175
          %s177 = sshll.u32 [#allocation7], 4
          %s178 = int_to_ptr.vmem [resolvable:$true] %s177
          %183 = dma.hbm_to_vmem [thread:$0]  %s176, 1024, %s178, [#allocation6], 64, 64, 4
        $region20: #{tpu_custom_call.1} parent=11 // pred_fallthru
          _
      $region12: #{tpu_custom_call.1} parent=5 // pred_fallthru
        _
      %p184 = scmp.lt.s32.totalorder %s21, 3
      // Predicated region
      $region21: #{tpu_custom_call.1} parent=5 // pred_check
        %p185 = pneg %p184
      $region22: #{tpu_custom_call.1} parent=5 // pred_check_branch
        %187 = sbr.rel (%p185) target = $region24
      $region23: #{tpu_custom_call.1} parent=5 // pred_region
        // Predicated region
        $region25: #{tpu_custom_call.1} parent=23 // pred_check
          %p188 = pneg %p41
        $region26: #{tpu_custom_call.1} parent=23 // pred_check_branch
          %190 = sbr.rel (%p188) target = $region28
        $region27: #{tpu_custom_call.1} parent=23 // pred_region
          %s191 = sand.u32 %s31, 1
          %s192 = scalar_lea.sflag [#allocation3], %s191
          %s193 = sand.u32 %s31, 1
          %s194 = smul.addr %s193, 64
          %s195 = scalar_lea.vmem [#allocation2], %s194
          %s196 = smul.u32 16, %s21
          %198 = vsyncadd %s192, 0
          %s199 = smul.addr %s196, 4
          %s200 = scalar_lea.hbm %s0, %s199
          %s201 = sshll.u32 %s200, 4
          %s202 = int_to_ptr.hbm [resolvable:$true] %s201
          %s203 = sshll.u32 %s195, 4
          %s204 = int_to_ptr.vmem [resolvable:$true] %s203
          %209 = dma.hbm_to_vmem [thread:$0]  %s202, 1024, %s204, %s192, 64, 64, 4
        $region28: #{tpu_custom_call.1} parent=23 // pred_fallthru
          _
      $region24: #{tpu_custom_call.1} parent=5 // pred_fallthru
        _
      %p210 = scmp.le.s32.totalorder 1, %s21
      %p211 = scmp.lt.s32.totalorder %s21, 4
      %p212 = pnand %p210, %p211
      %p213 = pneg %p212
      // Predicated region
      $region29: #{tpu_custom_call.1} parent=5 // pred_check
        _
      $region30: #{tpu_custom_call.1} parent=5 // pred_check_branch
        %215 = sbr.rel (%p212) target = $region32
      $region31: #{tpu_custom_call.1} parent=5 // pred_region
        %s216 = ssub.s32 %s21, 1
        %s217 = sand.u32 %s34, 1
        %s218 = scalar_lea.sflag [#allocation3], %s217
        %s219 = sand.u32 %s34, 1
        %s220 = smul.addr %s219, 64
        %s221 = scalar_lea.vmem [#allocation2], %s220
        // Predicated region
        $region33: #{tpu_custom_call.1} parent=31 // pred_check
          %p222 = pneg %p47
        $region34: #{tpu_custom_call.1} parent=31 // pred_check_branch
          %224 = sbr.rel (%p222) target = $region36
        $region35: #{tpu_custom_call.1} parent=31 // pred_region
          %226 = dma.done %s218, 1024
        $region36: #{tpu_custom_call.1} parent=31 // pred_fallthru
          _
        // Predicated region
        $region37: #{tpu_custom_call.1} parent=31 // pred_check
          %p227 = pneg %p68
        $region38: #{tpu_custom_call.1} parent=31 // pred_check_branch
          %229 = sbr.rel (%p227) target = $region40
        $region39: #{tpu_custom_call.1} parent=31 // pred_region
          %231 = dma.done [#allocation6], 1024
        $region40: #{tpu_custom_call.1} parent=31 // pred_fallthru
          _
        // Predicated region
        $region41: #{tpu_custom_call.1} parent=31 // pred_check
          %p232 = pneg %p89
        $region42: #{tpu_custom_call.1} parent=31 // pred_check_branch
          %234 = sbr.rel (%p232) target = $region44
        $region43: #{tpu_custom_call.1} parent=31 // pred_region
          %236 = dma.done [#allocation6], 1024
        $region44: #{tpu_custom_call.1} parent=31 // pred_fallthru
          _
        %s237 = sand.u32 %s34, 1
        %s238 = scalar_lea.sflag [#allocation3], %s237
        %s239 = sand.u32 %s34, 1
        %s240 = smul.addr %s239, 64
        %s241 = scalar_lea.vmem [#allocation2], %s240
        %p242 = pneg %p47
        %p243 = pneg %p44
        %p244 = pneg %p68
        %p245 = pneg %p65
        %p246 = pneg %p89
        %p247 = pneg %p86
        %p248 = pneg %p115
        %p249 = pneg %p112
        %s250 = sand.u32 %s102, 1
        %s251 = scalar_lea.sflag [#allocation4], %s250
        %s252 = sand.u32 %s102, 1
        %s253 = smul.addr %s252, 64
        %s254 = scalar_lea.vmem [#allocation8], %s253
        %p255 = pneg %p141
        %p256 = pneg %p138
        %s257 = sand.u32 %s128, 1
        %s258 = scalar_lea.sflag [#allocation10], %s257
        %s259 = sand.u32 %s128, 1
        %s260 = smul.addr %s259, 128
        %s261 = scalar_lea.vmem [#allocation9], %s260
        %s262 = smul.u32 16, %s26
        %s263 = smul.u32 16, %s26
        %s264 = smul.u32 16, %s26
        %v265 = vld [vmem:[%s221] sm:$0xf]
        %v266 = vld [vmem:[%s221 + $0x4] sm:$0xf]
        %v267 = vld [vmem:[%s221 + $0x8] sm:$0xf]
        %v268 = vld [vmem:[%s221 + $0xc] sm:$0xf]
        %v269 = vld [vmem:[%s221 + $0x10] sm:$0xf]
        %v270 = vld [vmem:[%s221 + $0x14] sm:$0xf]
        %v271 = vld [vmem:[%s221 + $0x18] sm:$0xf]
        %v272 = vld [vmem:[%s221 + $0x1c] sm:$0xf]
        %v273 = vld [vmem:[%s221 + $0x20] sm:$0xf]
        %v274 = vld [vmem:[%s221 + $0x24] sm:$0xf]
        %v275 = vld [vmem:[%s221 + $0x28] sm:$0xf]
        %v276 = vld [vmem:[%s221 + $0x2c] sm:$0xf]
        %v277 = vld [vmem:[%s221 + $0x30] sm:$0xf]
        %v278 = vld [vmem:[%s221 + $0x34] sm:$0xf]
        %v279 = vld [vmem:[%s221 + $0x38] sm:$0xf]
        %v280 = vld [vmem:[%s221 + $0x3c] sm:$0xf]
        %v281 = vld [vmem:[#allocation5] sm:$0xf]
        %v282 = vld [vmem:[#allocation5 + $0x4] sm:$0xf]
        %v283 = vld [vmem:[#allocation5 + $0x8] sm:$0xf]
        %v284 = vld [vmem:[#allocation5 + $0xc] sm:$0xf]
        %v285 = vld [vmem:[#allocation5 + $0x10] sm:$0xf]
        %v286 = vld [vmem:[#allocation5 + $0x14] sm:$0xf]
        %v287 = vld [vmem:[#allocation5 + $0x18] sm:$0xf]
        %v288 = vld [vmem:[#allocation5 + $0x1c] sm:$0xf]
        %v289 = vld [vmem:[#allocation5 + $0x20] sm:$0xf]
        %v290 = vld [vmem:[#allocation5 + $0x24] sm:$0xf]
        %v291 = vld [vmem:[#allocation5 + $0x28] sm:$0xf]
        %v292 = vld [vmem:[#allocation5 + $0x2c] sm:$0xf]
        %v293 = vld [vmem:[#allocation5 + $0x30] sm:$0xf]
        %v294 = vld [vmem:[#allocation5 + $0x34] sm:$0xf]
        %v295 = vld [vmem:[#allocation5 + $0x38] sm:$0xf]
        %v296 = vld [vmem:[#allocation5 + $0x3c] sm:$0xf]
        %v313 = vunpack.c.l.b16 %v265
        %v314 = vunpack.c.l.b16 %v266
        %v315 = vunpack.c.l.b16 %v267
        %v316 = vunpack.c.l.b16 %v268
        %v317 = vunpack.c.l.b16 %v269
        %v318 = vunpack.c.l.b16 %v270
        %v319 = vunpack.c.l.b16 %v271
        %v320 = vunpack.c.l.b16 %v272
        %v321 = vunpack.c.l.b16 %v273
        %v322 = vunpack.c.l.b16 %v274
        %v323 = vunpack.c.l.b16 %v275
        %v324 = vunpack.c.l.b16 %v276
        %v325 = vunpack.c.l.b16 %v277
        %v326 = vunpack.c.l.b16 %v278
        %v327 = vunpack.c.l.b16 %v279
        %v328 = vunpack.c.l.b16 %v280
        %v329 = vpack.c.b16 %v314, %v313
        %v330 = vpack.c.b16 %v316, %v315
        %v331 = vpack.c.b16 %v318, %v317
        %v332 = vpack.c.b16 %v320, %v319
        %v333 = vpack.c.b16 %v322, %v321
        %v334 = vpack.c.b16 %v324, %v323
        %v335 = vpack.c.b16 %v326, %v325
        %v336 = vpack.c.b16 %v328, %v327
        %v361 = vunpack.c.l.b16 %v281
        %v362 = vunpack.c.l.b16 %v282
        %v363 = vunpack.c.l.b16 %v283
        %v364 = vunpack.c.l.b16 %v284
        %v365 = vunpack.c.l.b16 %v285
        %v366 = vunpack.c.l.b16 %v286
        %v367 = vunpack.c.l.b16 %v287
        %v368 = vunpack.c.l.b16 %v288
        %v369 = vunpack.c.l.b16 %v289
        %v370 = vunpack.c.l.b16 %v290
        %v371 = vunpack.c.l.b16 %v291
        %v372 = vunpack.c.l.b16 %v292
        %v373 = vunpack.c.l.b16 %v293
        %v374 = vunpack.c.l.b16 %v294
        %v375 = vunpack.c.l.b16 %v295
        %v376 = vunpack.c.l.b16 %v296
        %v377 = vpack.c.b16 %v362, %v361
        %v378 = vpack.c.b16 %v364, %v363
        %v379 = vpack.c.b16 %v366, %v365
        %v380 = vpack.c.b16 %v368, %v367
        %v381 = vpack.c.b16 %v370, %v369
        %v382 = vpack.c.b16 %v372, %v371
        %v383 = vpack.c.b16 %v374, %v373
        %v384 = vpack.c.b16 %v376, %v375
        %393 = vmatpush.bf16.msra.mxu0 %v384
        %394 = vmatpush.bf16.msra.mxu0 %v383
        %395 = vmatpush.bf16.msra.mxu0 %v382
        %396 = vmatpush.bf16.msra.mxu0 %v381
        %397 = vmatpush.bf16.msra.mxu0 %v380
        %398 = vmatpush.bf16.msra.mxu0 %v379
        %399 = vmatpush.bf16.msra.mxu0 %v378
        %400 = vmatpush.bf16.msra.mxu0 %v377
        %401 = vmatmul.bf16.gmra.mxu0 %v329
        %v402 = vpop.f32.mrf.mxu0
        %v403 = vadd.f32 0.0, %v402
        %v404 = vpop.f32.mrf.mxu0
        %v405 = vadd.f32 0.0, %v404
        %406 = vmatmul.bf16.gmra.mxu0 %v330
        %v407 = vpop.f32.mrf.mxu0
        %v408 = vadd.f32 0.0, %v407
        %v409 = vpop.f32.mrf.mxu0
        %v410 = vadd.f32 0.0, %v409
        %411 = vmatmul.bf16.gmra.mxu0 %v331
        %v412 = vpop.f32.mrf.mxu0
        %v413 = vadd.f32 0.0, %v412
        %v414 = vpop.f32.mrf.mxu0
        %v415 = vadd.f32 0.0, %v414
        %416 = vmatmul.bf16.gmra.mxu0 %v332
        %v417 = vpop.f32.mrf.mxu0
        %v418 = vadd.f32 0.0, %v417
        %v419 = vpop.f32.mrf.mxu0
        %v420 = vadd.f32 0.0, %v419
        %421 = vmatmul.bf16.gmra.mxu0 %v333
        %v422 = vpop.f32.mrf.mxu0
        %v423 = vadd.f32 0.0, %v422
        %v424 = vpop.f32.mrf.mxu0
        %v425 = vadd.f32 0.0, %v424
        %426 = vmatmul.bf16.gmra.mxu0 %v334
        %v427 = vpop.f32.mrf.mxu0
        %v428 = vadd.f32 0.0, %v427
        %v429 = vpop.f32.mrf.mxu0
        %v430 = vadd.f32 0.0, %v429
        %431 = vmatmul.bf16.gmra.mxu0 %v335
        %v432 = vpop.f32.mrf.mxu0
        %v433 = vadd.f32 0.0, %v432
        %v434 = vpop.f32.mrf.mxu0
        %v435 = vadd.f32 0.0, %v434
        %436 = vmatmul.bf16.gmra.mxu0 %v336
        %v437 = vpop.f32.mrf.mxu0
        %v438 = vadd.f32 0.0, %v437
        %v439 = vpop.f32.mrf.mxu0
        %v440 = vadd.f32 0.0, %v439
        %441 = vdwg.mxu0
        %v442 = vpack.c.bf16 %v403, %v403
        %v443 = vpack.c.bf16 %v405, %v405
        %v444 = vpack.c.bf16 %v408, %v408
        %v445 = vpack.c.bf16 %v410, %v410
        %v446 = vpack.c.bf16 %v413, %v413
        %v447 = vpack.c.bf16 %v415, %v415
        %v448 = vpack.c.bf16 %v418, %v418
        %v449 = vpack.c.bf16 %v420, %v420
        %v450 = vpack.c.bf16 %v423, %v423
        %v451 = vpack.c.bf16 %v425, %v425
        %v452 = vpack.c.bf16 %v428, %v428
        %v453 = vpack.c.bf16 %v430, %v430
        %v454 = vpack.c.bf16 %v433, %v433
        %v455 = vpack.c.bf16 %v435, %v435
        %v456 = vpack.c.bf16 %v438, %v438
        %v457 = vpack.c.bf16 %v440, %v440
        %458 = vst [vmem:[%s254] sm:$0xf] %v442
        %459 = vst [vmem:[%s254 + $0x4] sm:$0xf] %v443
        %460 = vst [vmem:[%s254 + $0x8] sm:$0xf] %v444
        %461 = vst [vmem:[%s254 + $0xc] sm:$0xf] %v445
        %462 = vst [vmem:[%s254 + $0x10] sm:$0xf] %v446
        %463 = vst [vmem:[%s254 + $0x14] sm:$0xf] %v447
        %464 = vst [vmem:[%s254 + $0x18] sm:$0xf] %v448
        %465 = vst [vmem:[%s254 + $0x1c] sm:$0xf] %v449
        %466 = vst [vmem:[%s254 + $0x20] sm:$0xf] %v450
        %467 = vst [vmem:[%s254 + $0x24] sm:$0xf] %v451
        %468 = vst [vmem:[%s254 + $0x28] sm:$0xf] %v452
        %469 = vst [vmem:[%s254 + $0x2c] sm:$0xf] %v453
        %470 = vst [vmem:[%s254 + $0x30] sm:$0xf] %v454
        %471 = vst [vmem:[%s254 + $0x34] sm:$0xf] %v455
        %472 = vst [vmem:[%s254 + $0x38] sm:$0xf] %v456
        %473 = vst [vmem:[%s254 + $0x3c] sm:$0xf] %v457
        %v474 = vld [vmem:[#allocation7] sm:$0xf]
        %v475 = vld [vmem:[#allocation7 + $0x4] sm:$0xf]
        %v476 = vld [vmem:[#allocation7 + $0x8] sm:$0xf]
        %v477 = vld [vmem:[#allocation7 + $0xc] sm:$0xf]
        %v478 = vld [vmem:[#allocation7 + $0x10] sm:$0xf]
        %v479 = vld [vmem:[#allocation7 + $0x14] sm:$0xf]
        %v480 = vld [vmem:[#allocation7 + $0x18] sm:$0xf]
        %v481 = vld [vmem:[#allocation7 + $0x1c] sm:$0xf]
        %v482 = vld [vmem:[#allocation7 + $0x20] sm:$0xf]
        %v483 = vld [vmem:[#allocation7 + $0x24] sm:$0xf]
        %v484 = vld [vmem:[#allocation7 + $0x28] sm:$0xf]
        %v485 = vld [vmem:[#allocation7 + $0x2c] sm:$0xf]
        %v486 = vld [vmem:[#allocation7 + $0x30] sm:$0xf]
        %v487 = vld [vmem:[#allocation7 + $0x34] sm:$0xf]
        %v488 = vld [vmem:[#allocation7 + $0x38] sm:$0xf]
        %v489 = vld [vmem:[#allocation7 + $0x3c] sm:$0xf]
        %v506 = vunpack.c.l.b16 %v442
        %v507 = vunpack.c.l.b16 %v443
        %v508 = vunpack.c.l.b16 %v444
        %v509 = vunpack.c.l.b16 %v445
        %v510 = vunpack.c.l.b16 %v446
        %v511 = vunpack.c.l.b16 %v447
        %v512 = vunpack.c.l.b16 %v448
        %v513 = vunpack.c.l.b16 %v449
        %v514 = vunpack.c.l.b16 %v450
        %v515 = vunpack.c.l.b16 %v451
        %v516 = vunpack.c.l.b16 %v452
        %v517 = vunpack.c.l.b16 %v453
        %v518 = vunpack.c.l.b16 %v454
        %v519 = vunpack.c.l.b16 %v455
        %v520 = vunpack.c.l.b16 %v456
        %v521 = vunpack.c.l.b16 %v457
        %v522 = vpack.c.b16 %v507, %v506
        %v523 = vpack.c.b16 %v509, %v508
        %v524 = vpack.c.b16 %v511, %v510
        %v525 = vpack.c.b16 %v513, %v512
        %v526 = vpack.c.b16 %v515, %v514
        %v527 = vpack.c.b16 %v517, %v516
        %v528 = vpack.c.b16 %v519, %v518
        %v529 = vpack.c.b16 %v521, %v520
        %v554 = vunpack.c.l.b16 %v474
        %v555 = vunpack.c.l.b16 %v475
        %v556 = vunpack.c.l.b16 %v476
        %v557 = vunpack.c.l.b16 %v477
        %v558 = vunpack.c.l.b16 %v478
        %v559 = vunpack.c.l.b16 %v479
        %v560 = vunpack.c.l.b16 %v480
        %v561 = vunpack.c.l.b16 %v481
        %v562 = vunpack.c.l.b16 %v482
        %v563 = vunpack.c.l.b16 %v483
        %v564 = vunpack.c.l.b16 %v484
        %v565 = vunpack.c.l.b16 %v485
        %v566 = vunpack.c.l.b16 %v486
        %v567 = vunpack.c.l.b16 %v487
        %v568 = vunpack.c.l.b16 %v488
        %v569 = vunpack.c.l.b16 %v489
        %v570 = vpack.c.b16 %v555, %v554
        %v571 = vpack.c.b16 %v557, %v556
        %v572 = vpack.c.b16 %v559, %v558
        %v573 = vpack.c.b16 %v561, %v560
        %v574 = vpack.c.b16 %v563, %v562
        %v575 = vpack.c.b16 %v565, %v564
        %v576 = vpack.c.b16 %v567, %v566
        %v577 = vpack.c.b16 %v569, %v568
        %586 = vmatpush.bf16.msra.mxu0 %v577
        %587 = vmatpush.bf16.msra.mxu0 %v576
        %588 = vmatpush.bf16.msra.mxu0 %v575
        %589 = vmatpush.bf16.msra.mxu0 %v574
        %590 = vmatpush.bf16.msra.mxu0 %v573
        %591 = vmatpush.bf16.msra.mxu0 %v572
        %592 = vmatpush.bf16.msra.mxu0 %v571
        %593 = vmatpush.bf16.msra.mxu0 %v570
        %594 = vmatmul.bf16.gmra.mxu0 %v522
        %v595 = vpop.f32.mrf.mxu0
        %v596 = vadd.f32 0.0, %v595
        %v597 = vpop.f32.mrf.mxu0
        %v598 = vadd.f32 0.0, %v597
        %599 = vmatmul.bf16.gmra.mxu0 %v523
        %v600 = vpop.f32.mrf.mxu0
        %v601 = vadd.f32 0.0, %v600
        %v602 = vpop.f32.mrf.mxu0
        %v603 = vadd.f32 0.0, %v602
        %604 = vmatmul.bf16.gmra.mxu0 %v524
        %v605 = vpop.f32.mrf.mxu0
        %v606 = vadd.f32 0.0, %v605
        %v607 = vpop.f32.mrf.mxu0
        %v608 = vadd.f32 0.0, %v607
        %609 = vmatmul.bf16.gmra.mxu0 %v525
        %v610 = vpop.f32.mrf.mxu0
        %v611 = vadd.f32 0.0, %v610
        %v612 = vpop.f32.mrf.mxu0
        %v613 = vadd.f32 0.0, %v612
        %614 = vmatmul.bf16.gmra.mxu0 %v526
        %v615 = vpop.f32.mrf.mxu0
        %v616 = vadd.f32 0.0, %v615
        %v617 = vpop.f32.mrf.mxu0
        %v618 = vadd.f32 0.0, %v617
        %619 = vmatmul.bf16.gmra.mxu0 %v527
        %v620 = vpop.f32.mrf.mxu0
        %v621 = vadd.f32 0.0, %v620
        %v622 = vpop.f32.mrf.mxu0
        %v623 = vadd.f32 0.0, %v622
        %624 = vmatmul.bf16.gmra.mxu0 %v528
        %v625 = vpop.f32.mrf.mxu0
        %v626 = vadd.f32 0.0, %v625
        %v627 = vpop.f32.mrf.mxu0
        %v628 = vadd.f32 0.0, %v627
        %629 = vmatmul.bf16.gmra.mxu0 %v529
        %v630 = vpop.f32.mrf.mxu0
        %v631 = vadd.f32 0.0, %v630
        %v632 = vpop.f32.mrf.mxu0
        %v633 = vadd.f32 0.0, %v632
        %634 = vdwg.mxu0
        %635 = vst [vmem:[%s261] sm:$0xff] %v596
        %636 = vst [vmem:[%s261 + $0x8] sm:$0xff] %v598
        %637 = vst [vmem:[%s261 + $0x10] sm:$0xff] %v601
        %638 = vst [vmem:[%s261 + $0x18] sm:$0xff] %v603
        %639 = vst [vmem:[%s261 + $0x20] sm:$0xff] %v606
        %640 = vst [vmem:[%s261 + $0x28] sm:$0xff] %v608
        %641 = vst [vmem:[%s261 + $0x30] sm:$0xff] %v611
        %642 = vst [vmem:[%s261 + $0x38] sm:$0xff] %v613
        %643 = vst [vmem:[%s261 + $0x40] sm:$0xff] %v616
        %644 = vst [vmem:[%s261 + $0x48] sm:$0xff] %v618
        %645 = vst [vmem:[%s261 + $0x50] sm:$0xff] %v621
        %646 = vst [vmem:[%s261 + $0x58] sm:$0xff] %v623
        %647 = vst [vmem:[%s261 + $0x60] sm:$0xff] %v626
        %648 = vst [vmem:[%s261 + $0x68] sm:$0xff] %v628
        %649 = vst [vmem:[%s261 + $0x70] sm:$0xff] %v631
        %650 = vst [vmem:[%s261 + $0x78] sm:$0xff] %v633
        %s651 = sand.u32 %s102, 1
        %s652 = scalar_lea.sflag [#allocation4], %s651
        %s653 = sand.u32 %s102, 1
        %s654 = smul.addr %s653, 64
        %s655 = scalar_lea.vmem [#allocation8], %s654
        %s656 = sand.u32 %s128, 1
        %s657 = scalar_lea.sflag [#allocation10], %s656
        %s658 = sand.u32 %s128, 1
        %s659 = smul.addr %s658, 128
        %s660 = scalar_lea.vmem [#allocation9], %s659
        // Predicated region
        $region45: #{tpu_custom_call.1} parent=31 // pred_check
          %p661 = pneg %p112
        $region46: #{tpu_custom_call.1} parent=31 // pred_check_branch
          %663 = sbr.rel (%p661) target = $region48
        $region47: #{tpu_custom_call.1} parent=31 // pred_region
          %s664 = smul.u32 16, %s26
          %666 = vsyncadd %s652, 0
          %s667 = smul.addr %s664, 4
          %s668 = scalar_lea.hbm %s3, %s667
          %s669 = sshll.u32 %s655, 4
          %s670 = int_to_ptr.vmem [resolvable:$true] %s669
          %s671 = sshll.u32 %s668, 4
          %s672 = int_to_ptr.hbm [resolvable:$true] %s671
          %677 = dma.vmem_to_hbm [thread:$0]  %s670, 1024, %s672, %s652, 64, 64, 4
        $region48: #{tpu_custom_call.1} parent=31 // pred_fallthru
          _
        // Predicated region
        $region49: #{tpu_custom_call.1} parent=31 // pred_check
          %p678 = pneg %p138
        $region50: #{tpu_custom_call.1} parent=31 // pred_check_branch
          %680 = sbr.rel (%p678) target = $region52
        $region51: #{tpu_custom_call.1} parent=31 // pred_region
          %s681 = smul.u32 16, %s26
          %683 = vsyncadd %s657, 0
          %s684 = smul.addr %s681, 8
          %s685 = scalar_lea.hbm %s4, %s684
          %s686 = sshll.u32 %s660, 4
          %s687 = int_to_ptr.vmem [resolvable:$true] %s686
          %s688 = sshll.u32 %s685, 4
          %s689 = int_to_ptr.hbm [resolvable:$true] %s688
          %694 = dma.vmem_to_hbm [thread:$0]  %s687, 2048, %s689, %s657, 128, 128, 8
        $region52: #{tpu_custom_call.1} parent=31 // pred_fallthru
          _
      $region32: #{tpu_custom_call.1} parent=5 // pred_fallthru
        _
      %p695 = scmp.le.s32.totalorder 2, %s21
      // Predicated region
      $region53: #{tpu_custom_call.1} parent=5 // pred_check
        %p696 = pneg %p695
      $region54: #{tpu_custom_call.1} parent=5 // pred_check_branch
        %698 = sbr.rel (%p696) target = $region56
      $region55: #{tpu_custom_call.1} parent=5 // pred_region
        %s699 = ssub.s32 %s21, 2
        // Predicated region
        $region57: #{tpu_custom_call.1} parent=55 // pred_check
          %p700 = pneg %p118
        $region58: #{tpu_custom_call.1} parent=55 // pred_check_branch
          %702 = sbr.rel (%p700) target = $region60
        $region59: #{tpu_custom_call.1} parent=55 // pred_region
          %s703 = sand.u32 %s103, 1
          %s704 = scalar_lea.sflag [#allocation4], %s703
          %s705 = sand.u32 %s103, 1
          %s706 = smul.addr %s705, 64
          %s707 = scalar_lea.vmem [#allocation8], %s706
          %709 = dma.done %s704, 1024
        $region60: #{tpu_custom_call.1} parent=55 // pred_fallthru
          _
        // Predicated region
        $region61: #{tpu_custom_call.1} parent=55 // pred_check
          %p710 = pneg %p144
        $region62: #{tpu_custom_call.1} parent=55 // pred_check_branch
          %712 = sbr.rel (%p710) target = $region64
        $region63: #{tpu_custom_call.1} parent=55 // pred_region
          %s713 = sand.u32 %s129, 1
          %s714 = scalar_lea.sflag [#allocation10], %s713
          %s715 = sand.u32 %s129, 1
          %s716 = smul.addr %s715, 128
          %s717 = scalar_lea.vmem [#allocation9], %s716
          %719 = dma.done %s714, 2048
        $region64: #{tpu_custom_call.1} parent=55 // pred_fallthru
          _
      $region56: #{tpu_custom_call.1} parent=5 // pred_fallthru
        _
    $region6: #{tpu_custom_call.1} parent=1 // loop_footer
      %s25 = sadd.s32 1, %s21
    $region7: #{tpu_custom_call.1} parent=1 // loop_footer_branch
      %20 = sbr.rel target = $region3
    $region8: #{tpu_custom_call.1} parent=1 // loop_exit
      _
    %720 = vsyncpa [#allocation3], 1
    %s721 = scalar_lea.sflag [#allocation3], 1
    %722 = vsyncpa %s721, 1
    %723 = vsyncpa [#allocation6], 1
    %724 = vsyncpa [#allocation4], 1
    %s725 = scalar_lea.sflag [#allocation4], 1
    %726 = vsyncpa %s725, 1
    %727 = vsyncpa [#allocation10], 1
    %s728 = scalar_lea.sflag [#allocation10], 1
    %729 = vsyncpa %s728, 1

</llo_original>
